<compile_context>
chip_gen: v5e
topology: v5e:2x2
jax: 0.10.0
libtpu: 0.0.40
codegen_flags: <defaults>
</compile_context>

<pallas_src>
import jax
import jax.numpy as jnp
from jax import lax
from jax.experimental import pallas as pl
from jax.experimental.pallas import tpu as pltpu

SUBLANE = 8


# ----------------------------------------------------------------------------
# Activation
# ----------------------------------------------------------------------------
def _mish_from_preact(z):
    """mish(z) = z * tanh(softplus(z)) with a single exp.

    p = e^z  =>  tanh(log(1+p)) = (p^2 + 2p) / (p^2 + 2p + 2)
    For z > 20 (PyTorch softplus threshold): softplus(z) ~= z, tanh(...) ~= 1.
    """
    p = jnp.exp(jnp.minimum(z, 20.0))
    num = p * (p + 2.0)
    t = num * pl.reciprocal(num + 2.0, approx=True)   # EUP slot, ~free
    return jnp.where(z > 20.0, z, z * t)


# ----------------------------------------------------------------------------
# Kernels
# ----------------------------------------------------------------------------
def cell_step_kernel(x_ref, inp_ref, wrec_ref, win_ref, b_ref, o_ref):
    """One CellModel.forward step.

    Two accumulating bf16 MXU dots (MXU accumulates for free), f32
    accumulation + activation math.  No wrapper-side concat/pad needed.
    """
    z = (
        jnp.dot(x_ref[...].astype(jnp.bfloat16), wrec_ref[...],
                preferred_element_type=jnp.float32)
        + jnp.dot(inp_ref[...].astype(jnp.bfloat16), win_ref[...],
                  preferred_element_type=jnp.float32)
        + b_ref[...]
    )
    o_ref[...] = _mish_from_preact(z).astype(o_ref.dtype)


def cell_seq_kernel(x0_ref, inp_ref, wrec_ref, win_ref, b_ref, o_ref, zin_ref):
    """Recurrent application over T steps in a SINGLE kernel invocation.

    Phase 1 (parallel): z_in = inputs @ W_in^T + b for ALL steps, one big
                        (T*B, I) x (I, N) MXU matmul -> VMEM scratch.
    Phase 2 (serial):   state_{t+1} = mish(state_t @ W_rec^T + z_in[t]),
                        state carried in registers as a bf16 fori_loop carry.
    """
    T, B, _ = o_ref.shape

    # ---- Phase 1: hoisted input projection + bias (off the serial chain) ----
    zin_ref[...] = (
        jnp.dot(inp_ref[...].astype(jnp.bfloat16), win_ref[...],
                preferred_element_type=jnp.float32)
        + b_ref[...]
    )

    # ---- Phase 2: serial recurrence -----------------------------------------
    wrec = wrec_ref[...]                      # hoist weight load out of the loop
    state0 = x0_ref[...].astype(jnp.bfloat16)

    def step(t, state):
        start = t * B
        if B % SUBLANE == 0:
            start = pl.multiple_of(start, SUBLANE)
        z = (jnp.dot(state, wrec, preferred_element_type=jnp.float32)
             + zin_ref[pl.ds(start, B), :])
        y = _mish_from_preact(z)
        o_ref[t] = y.astype(o_ref.dtype)
        return y.astype(jnp.bfloat16)         # bf16 carry feeds MXU LHS directly

    lax.fori_loop(0, T, step, state0, unroll=True)


# ----------------------------------------------------------------------------
# Wrappers
# ----------------------------------------------------------------------------
def cell_forward(x_t, input_t, w_rec_bf, w_in_bf, bias):
    """CellModel.forward: one step.

    x_t: (B, N) f32, input_t: (B, I) f32,
    w_rec_bf: (N, N) bf16 = W_rec^T, w_in_bf: (I, N) bf16 = W_in^T,
    bias: (1, N) f32.  Returns (B, N) f32.
    """
    B, N = x_t.shape
    I = input_t.shape[1]
    return pl.pallas_call(
        cell_step_kernel,
        out_shape=jax.ShapeDtypeStruct((B, N), jnp.float32),
        in_specs=[
            pl.BlockSpec((B, N), lambda: (0, 0)),   # x_t       f32
            pl.BlockSpec((B, I), lambda: (0, 0)),   # input_t   f32
            pl.BlockSpec((N, N), lambda: (0, 0)),   # W_rec^T   bf16
            pl.BlockSpec((I, N), lambda: (0, 0)),   # W_in^T    bf16
            pl.BlockSpec((1, N), lambda: (0, 0)),   # bias      f32
        ],
        out_specs=pl.BlockSpec((B, N), lambda: (0, 0)),
    )(x_t, input_t, w_rec_bf, w_in_bf, bias)


def cell_forward_sequence(x0, inputs, w_rec_bf, w_in_bf, bias):
    """Apply the cell recurrently over inputs (T, B, I), one kernel call.

    All operands (inputs, weights, per-step z_in scratch, outputs) are
    VMEM-resident for the whole call at these sizes.
    """
    T, B, I = inputs.shape
    N = w_rec_bf.shape[0]
    inp2d = inputs.reshape(T * B, I)            # contiguous, metadata-only
    return pl.pallas_call(
        cell_seq_kernel,
        out_shape=jax.ShapeDtypeStruct((T, B, N), jnp.float32),
        in_specs=[
            pl.BlockSpec((B, N), lambda: (0, 0)),        # x0        f32
            pl.BlockSpec((T * B, I), lambda: (0, 0)),    # inputs    f32
            pl.BlockSpec((N, N), lambda: (0, 0)),        # W_rec^T   bf16
            pl.BlockSpec((I, N), lambda: (0, 0)),        # W_in^T    bf16
            pl.BlockSpec((1, N), lambda: (0, 0)),        # bias      f32
        ],
        out_specs=pl.BlockSpec((T, B, N), lambda: (0, 0, 0)),
        scratch_shapes=[pltpu.VMEM((T * B, N), jnp.float32)],  # hoisted z_in
    )(x0, inp2d, w_rec_bf, w_in_bf, bias)


# ----------------------------------------------------------------------------
# Parameter init (matches the PyTorch module) + references
# ----------------------------------------------------------------------------
def xavier_uniform(key, shape, gain):
    # nn.init.xavier_uniform_ on nn.Linear.weight (out, in):
    fan_out, fan_in = shape
    bound = gain * (6.0 / (fan_in + fan_out)) ** 0.5
    return jax.random.uniform(key, shape, jnp.float32, minval=-bound, maxval=bound)


def init_params(key, neuron_number, input_size, std=0.001):
    k_in, k_rec, k_b = jax.random.split(key, 3)
    w_in = xavier_uniform(k_in, (neuron_number, input_size), gain=std)       # Linear(I,N).weight
    w_rec = xavier_uniform(k_rec, (neuron_number, neuron_number), gain=std)  # Linear(N,N).weight
    bias = jax.random.normal(k_b, (1, neuron_number), jnp.float32) * std

    w_rec_t = w_rec.T                         # (N, N) — so kernel does x @ W^T
    w_in_t = w_in.T                           # (I, N)
    return dict(
        w_rec_t=w_rec_t, w_in_t=w_in_t, bias=bias,        # f32, for references
        w_rec_bf=w_rec_t.astype(jnp.bfloat16),             # MXU copies (bf16)
        w_in_bf=w_in_t.astype(jnp.bfloat16),
    )


def _mish_rational_ref(z):
    p = jnp.exp(jnp.minimum(z, 20.0))
    num = p * (p + 2.0)
    return jnp.where(z > 20.0, z, z * (num / (num + 2.0)))


def matched_step(x_t, input_t, w_rec_t, w_in_t, bias):
    """Pure-JAX reference mirroring the kernel numerics (bf16 matmul inputs,
    exact division in mish — kernel uses approx reciprocal)."""
    z = (
        jnp.dot(x_t.astype(jnp.bfloat16), w_rec_t.astype(jnp.bfloat16),
                preferred_element_type=jnp.float32)
        + jnp.dot(input_t.astype(jnp.bfloat16), w_in_t.astype(jnp.bfloat16),
                  preferred_element_type=jnp.float32)
        + bias
    )
    return _mish_rational_ref(z)


def reference_forward_f32(x_t, input_t, w_rec_t, w_in_t, bias):
    """Full-f32 PyTorch-style reference: F.mish(linear + linear + bias)."""
    z = x_t @ w_rec_t + input_t @ w_in_t + bias
    return z * jnp.tanh(jax.nn.softplus(z))


# ----------------------------------------------------------------------------
if __name__ == "__main__":
    neuron_number = 32
    input_size = 16
    batch = 8
    seq_len = 8

    key = jax.random.PRNGKey(0)
    k_param, k_x, k_inp, k_seq = jax.random.split(key, 4)

    params = init_params(k_param, neuron_number, input_size)
    x_t = jax.random.normal(k_x, (batch, neuron_number), jnp.float32)
    input_t = jax.random.normal(k_inp, (batch, input_size), jnp.float32)
    inputs_seq = jax.random.normal(k_seq, (seq_len, batch, input_size), jnp.float32)

    # --- single CellModel.forward step (no wrapper-side concat/pad HLOs) ----
    out = cell_forward(x_t, input_t, params["w_rec_bf"], params["w_in_bf"],
                       params["bias"])
    out = jax.block_until_ready(out)
    assert out.shape == (batch, neuron_number)

    ref_m = matched_step(x_t, input_t, params["w_rec_t"], params["w_in_t"],
                         params["bias"])
    # Deliberately loosened tolerance: kernel uses pl.reciprocal(approx=True).
    assert jnp.allclose(out, ref_m, atol=1e-4, rtol=1e-2), \
        float(jnp.max(jnp.abs(out - ref_m)))

    ref_f = reference_forward_f32(x_t, input_t, params["w_rec_t"],
                                  params["w_in_t"], params["bias"])
    assert jnp.allclose(out, ref_f, atol=5e-4, rtol=5e-2), \
        float(jnp.max(jnp.abs(out - ref_f)))

    # --- recurrent sequence: single kernel call, hoisted input projection ---
    seq_out = cell_forward_sequence(x_t, inputs_seq, params["w_rec_bf"],
                                    params["w_in_bf"], params["bias"])
    seq_out = jax.block_until_ready(seq_out)
    assert seq_out.shape == (seq_len, batch, neuron_number)

    st = x_t
    refs = []
    for t in range(seq_len):
        st = matched_step(st, inputs_seq[t], params["w_rec_t"],
                          params["w_in_t"], params["bias"])
        refs.append(st)
    ref_seq = jnp.stack(refs)
    assert jnp.allclose(seq_out, ref_seq, atol=2e-4, rtol=1e-2), \
        float(jnp.max(jnp.abs(seq_out - ref_seq)))

    print("KERNEL_OK")
</pallas_src>

<mosaic_0001>
module attributes {stable_mosaic.version = 11 : i64} {
  func.func @cell_step_kernel(%arg0: memref<8x32xf32, #tpu.memory_space<vmem>>, %arg1: memref<8x16xf32, #tpu.memory_space<vmem>>, %arg2: memref<32x32xbf16, #tpu.memory_space<vmem>>, %arg3: memref<16x32xbf16, #tpu.memory_space<vmem>>, %arg4: memref<1x32xf32, #tpu.memory_space<vmem>>, %arg5: memref<8x32xf32, #tpu.memory_space<vmem>>) attributes {dimension_semantics = [], scalar_prefetch = 0 : i64, scratch_operands = 0 : i64, tpu.core_type = #tpu.core_type<tc>} {
    %c0 = arith.constant 0 : index
    %c0_0 = arith.constant 0 : index
    %0 = vector.load %arg0[%c0, %c0_0] : memref<8x32xf32, #tpu.memory_space<vmem>>, vector<8x32xf32>
    %1 = arith.truncf %0 : vector<8x32xf32> to vector<8x32xbf16>
    %c0_1 = arith.constant 0 : index
    %c0_2 = arith.constant 0 : index
    %2 = vector.load %arg2[%c0_1, %c0_2] : memref<32x32xbf16, #tpu.memory_space<vmem>>, vector<32x32xbf16>
    %cst = arith.constant dense<0.000000e+00> : vector<8x32xf32>
    %3 = tpu.matmul %1, %2, %cst {dimension_numbers = #tpu.dot_dimension_numbers<[1], [0], [0], [1], [0, 0, 1, 1], [], []>} : vector<8x32xbf16>, vector<32x32xbf16>, vector<8x32xf32> -> vector<8x32xf32>
    %c0_3 = arith.constant 0 : index
    %c0_4 = arith.constant 0 : index
    %4 = vector.load %arg1[%c0_3, %c0_4] : memref<8x16xf32, #tpu.memory_space<vmem>>, vector<8x16xf32>
    %5 = arith.truncf %4 : vector<8x16xf32> to vector<8x16xbf16>
    %c0_5 = arith.constant 0 : index
    %c0_6 = arith.constant 0 : index
    %6 = vector.load %arg3[%c0_5, %c0_6] : memref<16x32xbf16, #tpu.memory_space<vmem>>, vector<16x32xbf16>
    %cst_7 = arith.constant dense<0.000000e+00> : vector<8x32xf32>
    %7 = tpu.matmul %5, %6, %cst_7 {dimension_numbers = #tpu.dot_dimension_numbers<[1], [0], [0], [1], [0, 0, 1, 1], [], []>} : vector<8x16xbf16>, vector<16x32xbf16>, vector<8x32xf32> -> vector<8x32xf32>
    %8 = arith.addf %3, %7 : vector<8x32xf32>
    %c0_8 = arith.constant 0 : index
    %c0_9 = arith.constant 0 : index
    %9 = vector.load %arg4[%c0_8, %c0_9] : memref<1x32xf32, #tpu.memory_space<vmem>>, vector<1x32xf32>
    %10 = vector.broadcast %9 : vector<1x32xf32> to vector<8x32xf32>
    %11 = arith.addf %8, %10 : vector<8x32xf32>
    %cst_10 = arith.constant 2.000000e+01 : f32
    %12 = vector.broadcast %cst_10 : f32 to vector<8x32xf32>
    %13 = arith.minimumf %11, %12 : vector<8x32xf32>
    %14 = math.exp %13 : vector<8x32xf32>
    %cst_11 = arith.constant 2.000000e+00 : f32
    %15 = vector.broadcast %cst_11 : f32 to vector<8x32xf32>
    %16 = arith.addf %14, %15 : vector<8x32xf32>
    %17 = arith.mulf %14, %16 : vector<8x32xf32>
    %cst_12 = arith.constant 2.000000e+00 : f32
    %18 = vector.broadcast %cst_12 : f32 to vector<8x32xf32>
    %19 = arith.addf %17, %18 : vector<8x32xf32>
    %20 = tpu.reciprocal %19 {approx = true} : vector<8x32xf32> -> vector<8x32xf32>
    %21 = arith.mulf %17, %20 : vector<8x32xf32>
    %cst_13 = arith.constant 2.000000e+01 : f32
    %22 = vector.broadcast %cst_13 : f32 to vector<8x32xf32>
    %23 = arith.cmpf ogt, %11, %22 : vector<8x32xf32>
    %24 = arith.mulf %11, %21 : vector<8x32xf32>
    %25 = arith.select %23, %11, %24 : vector<8x32xi1>, vector<8x32xf32>
    %c0_14 = arith.constant 0 : index
    %c0_15 = arith.constant 0 : index
    %26 = vector.load %arg5[%c0_14, %c0_15] : memref<8x32xf32, #tpu.memory_space<vmem>>, vector<8x32xf32>
    tpu.vector_store %arg5[%c0_14, %c0_15], %25 {strides = array<i32>} : memref<8x32xf32, #tpu.memory_space<vmem>>, vector<8x32xf32>,
    return
  }
}

</mosaic_0001>

<llo_original>
// kernel: tpu_custom_call.1
$region0: #{tpu_custom_call.1}
  #allocation0 [shape = 'u32[]', space=smem, size = 0x4, offset = 0x4, fixed_abs, tag = 'smem constant byte address 0x4 - core index']
  #allocation1 [shape = 'u32[72,128]{1,0:T(1,128)}', space=vmem, size = 0x9000, scoped, tag = 'internal scratch']
  %s0 = inlined_call_operand.hbm [shape: f32[8,32], index: 0, kind: input, shape index: {}]
  %s1 = inlined_call_operand.hbm [shape: f32[8,16], index: 1, kind: input, shape index: {}]
  %s2 = inlined_call_operand.hbm [shape: bf16[32,32], index: 2, kind: input, shape index: {}]
  %s3 = inlined_call_operand.hbm [shape: bf16[16,32], index: 3, kind: input, shape index: {}]
  %s4 = inlined_call_operand.vmem [shape: f32[1,32], index: 4, kind: input, shape index: {}]
  %s5 = inlined_call_operand.hbm [shape: f32[8,32], index: 5, kind: output, shape index: {}]
  %s6 = sld [smem:[#allocation0]]
  $region46: #{tpu_custom_call.1} parent=0
    _
  %s8 = ssub.s32 1, %s6
  %s9 = scalar_select 0, %s8, %s6
  $region1: #{tpu_custom_call.1} parent=0
    #allocation2 [shape = 'u8[4096]{0}', space=vmem, size = 0x1000, scoped, tag = 'input window, operand 0, single buffered']
    #allocation3 [shape = 's32[1]{0}', space=sflag, size = 0x4, scoped, tag = 'scoped memory for tpu_custom_call.1']
    #allocation4 [shape = 's32[1]{0}', space=sflag, size = 0x4, scoped, tag = 'scoped memory for tpu_custom_call.1']
    #allocation5 [shape = 'u8[4096]{0}', space=vmem, size = 0x1000, scoped, tag = 'input window, operand 1, single buffered']
    #allocation6 [shape = 's32[1]{0}', space=sflag, size = 0x4, scoped, tag = 'scoped memory for tpu_custom_call.1']
    #allocation7 [shape = 'u8[8192]{0}', space=vmem, size = 0x2000, scoped, tag = 'input window, operand 2, single buffered']
    #allocation8 [shape = 'u8[4096]{0}', space=vmem, size = 0x1000, scoped, tag = 'input window, operand 3, single buffered']
    #allocation9 [shape = 's32[1]{0}', space=sflag, size = 0x4, scoped, tag = 'scoped memory for tpu_custom_call.1']
    #allocation10 [shape = 'u8[4096]{0}', space=vmem, size = 0x1000, scoped, tag = 'output window, operand 0, single buffered']
    %10 = vsyncpa [#allocation3], 0
    %11 = vsyncpa [#allocation6], 0
    %12 = vsyncpa [#allocation9], 0
    %13 = vsyncpa [#allocation4], 0
    // Predicated region
    $region2: #{tpu_custom_call.1} parent=1 // pred_check
      _
    $region3: #{tpu_custom_call.1} parent=1 // pred_check_branch
      %15 = sbr.rel (0) target = $region5
    $region4: #{tpu_custom_call.1} parent=1 // pred_region
      %17 = vsyncadd [#allocation3], 0
      %s19 = sshll.u32 %s0, 4
      %s20 = int_to_ptr.hbm [resolvable:$true] %s19
      %s21 = sshll.u32 [#allocation2], 4
      %s22 = int_to_ptr.vmem [resolvable:$true] %s21
      %24 = dma.hbm_to_vmem [thread:$0]  %s20, 128, %s22, [#allocation3]
    $region5: #{tpu_custom_call.1} parent=1 // pred_fallthru
      _
    // Predicated region
    $region6: #{tpu_custom_call.1} parent=1 // pred_check
      _
    $region7: #{tpu_custom_call.1} parent=1 // pred_check_branch
      %26 = sbr.rel (0) target = $region9
    $region8: #{tpu_custom_call.1} parent=1 // pred_region
      %28 = vsyncadd [#allocation6], 0
      %s30 = sshll.u32 %s1, 4
      %s31 = int_to_ptr.hbm [resolvable:$true] %s30
      %s32 = sshll.u32 [#allocation5], 4
      %s33 = int_to_ptr.vmem [resolvable:$true] %s32
      %35 = dma.hbm_to_vmem [thread:$0]  %s31, 128, %s33, [#allocation6]
    $region9: #{tpu_custom_call.1} parent=1 // pred_fallthru
      _
    // Predicated region
    $region10: #{tpu_custom_call.1} parent=1 // pred_check
      _
    $region11: #{tpu_custom_call.1} parent=1 // pred_check_branch
      %37 = sbr.rel (0) target = $region13
    $region12: #{tpu_custom_call.1} parent=1 // pred_region
      %39 = vsyncadd [#allocation6], 0
      %s40 = sshll.u32 %s2, 4
      %s41 = int_to_ptr.hbm [resolvable:$true] %s40
      %s42 = sshll.u32 [#allocation7], 4
      %s43 = int_to_ptr.vmem [resolvable:$true] %s42
      %48 = dma.hbm_to_vmem [thread:$0]  %s41, 256, %s43, [#allocation6], 64, 64, 4
    $region13: #{tpu_custom_call.1} parent=1 // pred_fallthru
      _
    // Predicated region
    $region14: #{tpu_custom_call.1} parent=1 // pred_check
      _
    $region15: #{tpu_custom_call.1} parent=1 // pred_check_branch
      %50 = sbr.rel (0) target = $region17
    $region16: #{tpu_custom_call.1} parent=1 // pred_region
      %52 = vsyncadd [#allocation9], 0
      %s53 = sshll.u32 %s3, 4
      %s54 = int_to_ptr.hbm [resolvable:$true] %s53
      %s55 = sshll.u32 [#allocation8], 4
      %s56 = int_to_ptr.vmem [resolvable:$true] %s55
      %61 = dma.hbm_to_vmem [thread:$0]  %s54, 128, %s56, [#allocation9], 64, 64, 4
    $region17: #{tpu_custom_call.1} parent=1 // pred_fallthru
      _
    // Predicated region
    $region18: #{tpu_custom_call.1} parent=1 // pred_check
      _
    $region19: #{tpu_custom_call.1} parent=1 // pred_check_branch
      %63 = sbr.rel (0) target = $region21
    $region20: #{tpu_custom_call.1} parent=1 // pred_region
      _
    $region21: #{tpu_custom_call.1} parent=1 // pred_fallthru
      _
    // Predicated region
    $region22: #{tpu_custom_call.1} parent=1 // pred_check
      _
    $region23: #{tpu_custom_call.1} parent=1 // pred_check_branch
      %65 = sbr.rel (0) target = $region25
    $region24: #{tpu_custom_call.1} parent=1 // pred_region
      %67 = dma.done [#allocation3], 128
    $region25: #{tpu_custom_call.1} parent=1 // pred_fallthru
      _
    // Predicated region
    $region26: #{tpu_custom_call.1} parent=1 // pred_check
      _
    $region27: #{tpu_custom_call.1} parent=1 // pred_check_branch
      %69 = sbr.rel (0) target = $region29
    $region28: #{tpu_custom_call.1} parent=1 // pred_region
      %71 = dma.done [#allocation6], 128
    $region29: #{tpu_custom_call.1} parent=1 // pred_fallthru
      _
    // Predicated region
    $region30: #{tpu_custom_call.1} parent=1 // pred_check
      _
    $region31: #{tpu_custom_call.1} parent=1 // pred_check_branch
      %73 = sbr.rel (0) target = $region33
    $region32: #{tpu_custom_call.1} parent=1 // pred_region
      %75 = dma.done [#allocation6], 256
    $region33: #{tpu_custom_call.1} parent=1 // pred_fallthru
      _
    // Predicated region
    $region34: #{tpu_custom_call.1} parent=1 // pred_check
      _
    $region35: #{tpu_custom_call.1} parent=1 // pred_check_branch
      %77 = sbr.rel (0) target = $region37
    $region36: #{tpu_custom_call.1} parent=1 // pred_region
      %79 = dma.done [#allocation9], 128
    $region37: #{tpu_custom_call.1} parent=1 // pred_fallthru
      _
    %v81 = vld [vmem:[#allocation2] sm:$0xff]
    %v82 = vpack.c.bf16 %v81, %v81
    %v83 = vld [vmem:[#allocation7] sm:$0xf]
    %v84 = vld [vmem:[#allocation7 + $0x4] sm:$0xf]
    %v85 = vld [vmem:[#allocation7 + $0x8] sm:$0xf]
    %v86 = vld [vmem:[#allocation7 + $0xc] sm:$0xf]
    %v87 = vld [vmem:[#allocation5] sm:$0xff]
    %v88 = vpack.c.bf16 %v87, %v87
    %v89 = vld [vmem:[#allocation8] sm:$0xf]
    %v90 = vld [vmem:[#allocation8 + $0x4] sm:$0xf]
    %v93 = vunpack.c.l.b16 %v89
    %v94 = vunpack.c.l.b16 %v90
    %v95 = vpack.c.b16 %v94, %v93
    %vm97 = vcmask 130048
    %v99 = vsel %vm97, %v88, 0
    %101 = vmatpush.bf16.msra.mxu0 0
    %102 = vmatpush.bf16.msra.mxu0 0
    %103 = vmatpush.bf16.msra.mxu0 0
    %104 = vmatpush.bf16.msra.mxu0 0
    %105 = vmatpush.bf16.msra.mxu0 0
    %106 = vmatpush.bf16.msra.mxu0 0
    %107 = vmatpush.bf16.msra.mxu0 0
    %108 = vmatpush.bf16.msra.mxu0 %v95
    %109 = vmatmul.bf16.gmra.mxu0 %v99
    %v110 = vpop.f32.mrf.mxu0
    %v111 = vadd.f32 0.0, %v110
    %v112 = vpop.f32.mrf.mxu0
    %113 = vdwg.mxu0
    %v118 = vunpack.c.l.b16 %v83
    %v119 = vunpack.c.l.b16 %v84
    %v120 = vunpack.c.l.b16 %v85
    %v121 = vunpack.c.l.b16 %v86
    %v122 = vpack.c.b16 %v119, %v118
    %v123 = vpack.c.b16 %v121, %v120
    %vm126 = vcmask 261120
    %v128 = vsel %vm126, %v82, 0
    %130 = vmatpush.bf16.msra.mxu0 0
    %131 = vmatpush.bf16.msra.mxu0 0
    %132 = vmatpush.bf16.msra.mxu0 0
    %133 = vmatpush.bf16.msra.mxu0 0
    %134 = vmatpush.bf16.msra.mxu0 0
    %135 = vmatpush.bf16.msra.mxu0 0
    %136 = vmatpush.bf16.msra.mxu0 %v123
    %137 = vmatpush.bf16.msra.mxu0 %v122
    %138 = vmatmul.bf16.gmra.mxu0 %v128
    %v139 = vpop.f32.mrf.mxu0
    %v140 = vadd.f32 %v111, %v139
    %v141 = vpop.f32.mrf.mxu0
    %142 = vdwg.mxu0
    %v143 = vld [vmem:[%s4] sm:$0x1]
    %v145 = vperm.slane %v143, 0
    %v147 = vadd.f32 %v140, %v145
    %v148 = vmin.f32 %v147, 20.0
    %v149 = vmul.f32 %v148, 1.442695
    %v150 = vpow.pop %v149
    %v151 = vadd.f32 %v150, 2.0
    %v152 = vmul.f32 %v150, %v151
    %v153 = vadd.f32 %v152, 2.0
    %v154 = vrcp.pop %v153
    %v155 = vmul.f32 %v152, %v154
    %vm156 = vcmp.gt.f32.partialorder %v147, 20.0
    %v157 = vmul.f32 %v147, %v155
    %v158 = vsel %vm156, %v147, %v157
    %159 = vst.msk [vmem:[#allocation10] sm:$0xff] %vm126, %v158
    // Predicated region
    $region38: #{tpu_custom_call.1} parent=1 // pred_check
      _
    $region39: #{tpu_custom_call.1} parent=1 // pred_check_branch
      %161 = sbr.rel (0) target = $region41
    $region40: #{tpu_custom_call.1} parent=1 // pred_region
      %163 = vsyncadd [#allocation4], 0
      %s165 = sshll.u32 [#allocation10], 4
      %s166 = int_to_ptr.vmem [resolvable:$true] %s165
      %s167 = sshll.u32 %s5, 4
      %s168 = int_to_ptr.hbm [resolvable:$true] %s167
      %170 = dma.vmem_to_hbm [thread:$0]  %s166, 128, %s168, [#allocation4]
    $region41: #{tpu_custom_call.1} parent=1 // pred_fallthru
      _
    // Predicated region
    $region42: #{tpu_custom_call.1} parent=1 // pred_check
      _
    $region43: #{tpu_custom_call.1} parent=1 // pred_check_branch
      %172 = sbr.rel (0) target = $region45
    $region44: #{tpu_custom_call.1} parent=1 // pred_region
      %174 = dma.done [#allocation4], 128
    $region45: #{tpu_custom_call.1} parent=1 // pred_fallthru
      _
    %175 = vsyncpa [#allocation3], 1
    %176 = vsyncpa [#allocation6], 1
    %177 = vsyncpa [#allocation9], 1
    %178 = vsyncpa [#allocation4], 1

</llo_original>
